<compile_context>
chip_gen: v7x
topology: tpu7x:2x2x1
jax: 0.10.0
libtpu: 0.0.40
codegen_flags: <defaults>
</compile_context>

<pallas_src>
import functools

import jax
import jax.numpy as jnp
from jax.experimental import pallas as pl
from jax.experimental.pallas import tpu as pltpu


def _round_up(x, m):
    return (x + m - 1) // m * m


def _cdiv(a, b):
    return (a + b - 1) // b


def _pad2(a, rows, cols):
    pr, pc = rows - a.shape[0], cols - a.shape[1]
    if pr or pc:
        a = jnp.pad(a, ((0, pr), (0, pc)))
    return a


def _has_bf16_vpu():
    """True on chips whose VPU/EUP handle bf16 natively (v6e, v7x)."""
    try:
        kind = jax.devices()[0].device_kind.lower()
    except Exception:
        return False
    return any(tag in kind for tag in ("v6", "v7", "tpu7", "7x"))


def _ann_kernel(x_ref, w1_ref, b1_ref, wg_ref, bg_ref, w3_ref, b3_ref, o_ref,
                *, n_generic, ew_dtype):
    mxu_dtype = w1_ref.dtype

    # layer1 + relu: cast x f32->bf16 in-kernel; MXU with f32 accumulation.
    x = x_ref[...].astype(mxu_dtype)
    h = jnp.dot(x, w1_ref[...], preferred_element_type=jnp.float32)
    # Bias row [1, Hp] is broadcast by the VPU (no materialized [tm, Hp] slab).
    h = jnp.maximum(h.astype(ew_dtype) + b1_ref[...], 0)

    # generic_layer + relu, applied n_generic times (1 or 4), fully unrolled.
    for _ in range(n_generic):
        h = jnp.dot(h.astype(mxu_dtype), wg_ref[...],
                    preferred_element_type=jnp.float32)
        h = jnp.maximum(h.astype(ew_dtype) + bg_ref[...], 0)

    # layer3 (out_features == 1): VPU multiply + f32 lane reduction instead of
    # a 1-lane-wide MXU pass.  b3 is read as an SMEM scalar.
    z = jnp.sum(h * w3_ref[...], axis=-1, dtype=jnp.float32, keepdims=True)
    z = z + b3_ref[0, 0]
    o_ref[...] = jax.nn.sigmoid(z).astype(o_ref.dtype)


def classification_ann_forward(x, params, interval, *, block_m=1024,
                               use_bf16=True, elementwise_bf16=None):
    """Runs the Classification_ANN forward pass as a single Pallas kernel.

    x: [B, F] float32
    params: dict with w1[F,H], b1[1,H], wg[H,H], bg[1,H], w3[H,1], b3[1,1]
    """
    B, F = x.shape
    H = params["w1"].shape[1]
    n_generic = 4 if interval == 3 else 1

    mxu_dtype = jnp.bfloat16 if use_bf16 else jnp.float32
    if elementwise_bf16 is None:
        elementwise_bf16 = use_bf16 and _has_bf16_vpu()
    ew_dtype = jnp.bfloat16 if (use_bf16 and elementwise_bf16) else jnp.float32

    Hp = _round_up(H, 128)

    # Batch tile: as large as block_m allows (amortizes the ~0.35us/step grid
    # overhead), but keep >= 2 grid steps when possible so the "parallel"
    # axis can be sharded across v7x's two TensorCores.
    tm = _round_up(min(block_m, B), 16)
    if _cdiv(B, tm) < 2 and tm >= 32:
        tm = _round_up(_cdiv(tm, 2), 16)
    grid_m = _cdiv(B, tm)

    # Weights: pad only the hidden (lane) dim to a multiple of 128.
    w1 = _pad2(params["w1"], F, Hp).astype(mxu_dtype)
    wg = _pad2(params["wg"], Hp, Hp).astype(mxu_dtype)
    b1 = _pad2(params["b1"], 1, Hp).astype(ew_dtype)
    bg = _pad2(params["bg"], 1, Hp).astype(ew_dtype)
    w3 = _pad2(params["w3"].T, 1, Hp).astype(ew_dtype)     # row vector [1, Hp]
    b3 = params["b3"].astype(jnp.float32)                   # [1, 1] SMEM scalar

    # Explicit VMEM limit only if the footprint could exceed v5e's 16 MiB
    # default scoped-VMEM (e.g. block_m=2048).
    wbytes = jnp.dtype(mxu_dtype).itemsize
    ebytes = jnp.dtype(ew_dtype).itemsize
    vmem_est = (2 * tm * F * 4 + 2 * tm * 4                 # x / out tiles (x2 buf)
                + 2 * (F * Hp + Hp * Hp) * wbytes           # w1, wg
                + 2 * 3 * Hp * ebytes                       # b1, bg, w3
                + 4 * tm * Hp * 4)                          # h intermediates headroom
    cp_kwargs = dict(dimension_semantics=("parallel",))
    if vmem_est > 12 * 1024 * 1024:
        cp_kwargs["vmem_limit_bytes"] = min(int(vmem_est * 1.25),
                                            64 * 1024 * 1024)

    kernel = functools.partial(_ann_kernel, n_generic=n_generic,
                               ew_dtype=ew_dtype)

    out = pl.pallas_call(
        kernel,
        out_shape=jax.ShapeDtypeStruct((B, 1), jnp.float32),
        grid=(grid_m,),
        in_specs=[
            pl.BlockSpec((tm, F), lambda i: (i, 0)),        # x tile (pipelined)
            pl.BlockSpec((F, Hp), lambda i: (0, 0)),        # w1 (VMEM-resident)
            pl.BlockSpec((1, Hp), lambda i: (0, 0)),        # b1
            pl.BlockSpec((Hp, Hp), lambda i: (0, 0)),       # wg
            pl.BlockSpec((1, Hp), lambda i: (0, 0)),        # bg
            pl.BlockSpec((1, Hp), lambda i: (0, 0)),        # w3 (row)
            pl.BlockSpec(memory_space=pltpu.MemorySpace.SMEM),  # b3 scalar
        ],
        out_specs=pl.BlockSpec((tm, 1), lambda i: (i, 0)),
        compiler_params=pltpu.CompilerParams(**cp_kwargs),
    )(x, w1, b1, wg, bg, w3, b3)

    return out


def init_params(key, n_features, n_hidden):
    """Deterministic parameter init (uniform, like PyTorch's default Linear)."""
    ks = jax.random.split(key, 6)

    def lin(kw, kb, fan_in, fan_out):
        bound = 1.0 / jnp.sqrt(fan_in)
        w = jax.random.uniform(kw, (fan_in, fan_out), jnp.float32, -bound, bound)
        b = jax.random.uniform(kb, (1, fan_out), jnp.float32, -bound, bound)
        return w, b

    w1, b1 = lin(ks[0], ks[1], n_features, n_hidden)
    wg, bg = lin(ks[2], ks[3], n_hidden, n_hidden)
    w3, b3 = lin(ks[4], ks[5], n_hidden, 1)
    return {"w1": w1, "b1": b1, "wg": wg, "bg": bg, "w3": w3, "b3": b3}


def reference_forward(x, p, interval):
    h = jnp.maximum(x @ p["w1"] + p["b1"], 0.0)
    n_generic = 4 if interval == 3 else 1
    for _ in range(n_generic):
        h = jnp.maximum(h @ p["wg"] + p["bg"], 0.0)
    return jax.nn.sigmoid(h @ p["w3"] + p["b3"])


if __name__ == "__main__":
    key = jax.random.PRNGKey(0)
    n_features = 32

    # (interval, batch): exercise both layer counts, the single-step grid with
    # a partial batch tile (B=8), and a multi-step grid with a partial final
    # tile (B=40 -> 2 grid steps).
    for interval, batch in ((2, 8), (3, 8), (2, 40)):
        n_hidden = {1: 10, 2: 128, 3: 300}[interval]
        k_x, k_p = jax.random.split(
            jax.random.fold_in(key, 10 * interval + batch))
        x = jax.random.normal(k_x, (batch, n_features), jnp.float32)
        params = init_params(k_p, n_features, n_hidden)

        ref = reference_forward(x, params, interval)

        # Exact-semantics check (all-f32 path).
        out_f32 = jax.block_until_ready(
            classification_ann_forward(x, params, interval, use_bf16=False))
        assert out_f32.shape == (batch, 1)
        assert jnp.allclose(out_f32, ref, atol=1e-5, rtol=1e-5)

        # Fast path: bf16 MXU inputs (+ bf16 elementwise on v6e/v7x),
        # f32 accumulation.
        out_bf16 = jax.block_until_ready(
            classification_ann_forward(x, params, interval, use_bf16=True))
        assert out_bf16.shape == (batch, 1)
        assert jnp.allclose(out_bf16, ref, atol=3e-2, rtol=3e-2)

    print("KERNEL_OK")
</pallas_src>

<mosaic_0001>
module attributes {stable_mosaic.version = 11 : i64} {
  func.func @_ann_kernel(%arg0: i32, %arg1: memref<16x32xf32, #tpu.memory_space<vmem>>, %arg2: memref<32x128xf32, #tpu.memory_space<vmem>>, %arg3: memref<1x128xf32, #tpu.memory_space<vmem>>, %arg4: memref<128x128xf32, #tpu.memory_space<vmem>>, %arg5: memref<1x128xf32, #tpu.memory_space<vmem>>, %arg6: memref<1x128xf32, #tpu.memory_space<vmem>>, %arg7: memref<1x1xf32, #tpu.memory_space<smem>>, %arg8: memref<16x1xf32, #tpu.memory_space<vmem>>) attributes {dimension_semantics = [#tpu.dimension_semantics<parallel>], iteration_bounds = array<i64: 1>, scalar_prefetch = 0 : i64, scratch_operands = 0 : i64, tpu.core_type = #tpu.core_type<tc>, window_params = [{transform_indices = @transform_0, window_bounds = array<i64: 16, 32>}, {pipeline_mode = #tpu.pipeline_mode<synchronous>, transform_indices = @transform_1, window_bounds = array<i64: 32, 128>}, {pipeline_mode = #tpu.pipeline_mode<synchronous>, transform_indices = @transform_2, window_bounds = array<i64: 1, 128>}, {pipeline_mode = #tpu.pipeline_mode<synchronous>, transform_indices = @transform_3, window_bounds = array<i64: 128, 128>}, {pipeline_mode = #tpu.pipeline_mode<synchronous>, transform_indices = @transform_4, window_bounds = array<i64: 1, 128>}, {pipeline_mode = #tpu.pipeline_mode<synchronous>, transform_indices = @transform_5, window_bounds = array<i64: 1, 128>}, {transform_indices = @transform_6, window_bounds = array<i64: 1, 1>}, {transform_indices = @transform_7, window_bounds = array<i64: 16, 1>}]} {
    %c0 = arith.constant 0 : index
    %c0_0 = arith.constant 0 : index
    %0 = vector.load %arg1[%c0, %c0_0] : memref<16x32xf32, #tpu.memory_space<vmem>>, vector<16x32xf32>
    %c0_1 = arith.constant 0 : index
    %c0_2 = arith.constant 0 : index
    %1 = vector.load %arg2[%c0_1, %c0_2] : memref<32x128xf32, #tpu.memory_space<vmem>>, vector<32x128xf32>
    %cst = arith.constant dense<0.000000e+00> : vector<16x128xf32>
    %2 = tpu.matmul %0, %1, %cst {dimension_numbers = #tpu.dot_dimension_numbers<[1], [0], [0], [1], [0, 0, 1, 1], [], []>} : vector<16x32xf32>, vector<32x128xf32>, vector<16x128xf32> -> vector<16x128xf32>
    %c0_3 = arith.constant 0 : index
    %c0_4 = arith.constant 0 : index
    %3 = vector.load %arg3[%c0_3, %c0_4] : memref<1x128xf32, #tpu.memory_space<vmem>>, vector<1x128xf32>
    %4 = vector.broadcast %3 : vector<1x128xf32> to vector<16x128xf32>
    %5 = arith.addf %2, %4 : vector<16x128xf32>
    %cst_5 = arith.constant 0.000000e+00 : f32
    %6 = vector.broadcast %cst_5 : f32 to vector<16x128xf32>
    %7 = arith.maximumf %5, %6 : vector<16x128xf32>
    %c0_6 = arith.constant 0 : index
    %c0_7 = arith.constant 0 : index
    %8 = vector.load %arg4[%c0_6, %c0_7] : memref<128x128xf32, #tpu.memory_space<vmem>>, vector<128x128xf32>
    %cst_8 = arith.constant dense<0.000000e+00> : vector<16x128xf32>
    %9 = tpu.matmul %7, %8, %cst_8 {dimension_numbers = #tpu.dot_dimension_numbers<[1], [0], [0], [1], [0, 0, 1, 1], [], []>} : vector<16x128xf32>, vector<128x128xf32>, vector<16x128xf32> -> vector<16x128xf32>
    %c0_9 = arith.constant 0 : index
    %c0_10 = arith.constant 0 : index
    %10 = vector.load %arg5[%c0_9, %c0_10] : memref<1x128xf32, #tpu.memory_space<vmem>>, vector<1x128xf32>
    %11 = vector.broadcast %10 : vector<1x128xf32> to vector<16x128xf32>
    %12 = arith.addf %9, %11 : vector<16x128xf32>
    %cst_11 = arith.constant 0.000000e+00 : f32
    %13 = vector.broadcast %cst_11 : f32 to vector<16x128xf32>
    %14 = arith.maximumf %12, %13 : vector<16x128xf32>
    %c0_12 = arith.constant 0 : index
    %c0_13 = arith.constant 0 : index
    %15 = vector.load %arg6[%c0_12, %c0_13] : memref<1x128xf32, #tpu.memory_space<vmem>>, vector<1x128xf32>
    %16 = vector.broadcast %15 : vector<1x128xf32> to vector<16x128xf32>
    %17 = arith.mulf %14, %16 : vector<16x128xf32>
    %cst_14 = arith.constant dense<0.000000e+00> : vector<16xf32>
    %18 = vector.multi_reduction <add>, %17, %cst_14 [1] : vector<16x128xf32> to vector<16xf32>
    %19 = vector.shape_cast %18 : vector<16xf32> to vector<16x1xf32>
    %c0_15 = arith.constant 0 : index
    %c0_16 = arith.constant 0 : index
    %20 = memref.load %arg7[%c0_15, %c0_16] : memref<1x1xf32, #tpu.memory_space<smem>>
    %21 = vector.broadcast %20 : f32 to vector<16x1xf32>
    %22 = arith.addf %19, %21 : vector<16x1xf32>
    %23 = arith.negf %22 : vector<16x1xf32>
    %24 = math.exp %23 : vector<16x1xf32>
    %cst_17 = arith.constant 1.000000e+00 : f32
    %25 = vector.broadcast %cst_17 : f32 to vector<16x1xf32>
    %26 = arith.addf %25, %24 : vector<16x1xf32>
    %27 = arith.divf %25, %26 : vector<16x1xf32>
    %c0_18 = arith.constant 0 : index
    %c0_19 = arith.constant 0 : index
    %28 = vector.load %arg8[%c0_18, %c0_19] : memref<16x1xf32, #tpu.memory_space<vmem>>, vector<16x1xf32>
    tpu.vector_store %arg8[%c0_18, %c0_19], %27 {strides = array<i32>} : memref<16x1xf32, #tpu.memory_space<vmem>>, vector<16x1xf32>,
    return
  }
  func.func @transform_0(%arg0: i32) -> (i32, i32) {
    %c0_i32 = arith.constant 0 : i32
    %c0_i32_0 = arith.constant 0 : i32
    return %arg0, %c0_i32 : i32, i32
  }
  func.func @transform_1(%arg0: i32) -> (i32, i32) {
    %c0_i32 = arith.constant 0 : i32
    %c0_i32_0 = arith.constant 0 : i32
    %c0_i32_1 = arith.constant 0 : i32
    return %c0_i32, %c0_i32_0 : i32, i32
  }
  func.func @transform_2(%arg0: i32) -> (i32, i32) {
    %c0_i32 = arith.constant 0 : i32
    %c0_i32_0 = arith.constant 0 : i32
    %c0_i32_1 = arith.constant 0 : i32
    return %c0_i32, %c0_i32_0 : i32, i32
  }
  func.func @transform_3(%arg0: i32) -> (i32, i32) {
    %c0_i32 = arith.constant 0 : i32
    %c0_i32_0 = arith.constant 0 : i32
    %c0_i32_1 = arith.constant 0 : i32
    return %c0_i32, %c0_i32_0 : i32, i32
  }
  func.func @transform_4(%arg0: i32) -> (i32, i32) {
    %c0_i32 = arith.constant 0 : i32
    %c0_i32_0 = arith.constant 0 : i32
    %c0_i32_1 = arith.constant 0 : i32
    return %c0_i32, %c0_i32_0 : i32, i32
  }
  func.func @transform_5(%arg0: i32) -> (i32, i32) {
    %c0_i32 = arith.constant 0 : i32
    %c0_i32_0 = arith.constant 0 : i32
    %c0_i32_1 = arith.constant 0 : i32
    return %c0_i32, %c0_i32_0 : i32, i32
  }
  func.func @transform_6(%arg0: i32) -> (i32, i32) {
    %c0_i32 = arith.constant 0 : i32
    %c0_i32_0 = arith.constant 0 : i32
    %c0_i32_1 = arith.constant 0 : i32
    return %c0_i32, %c0_i32_0 : i32, i32
  }
  func.func @transform_7(%arg0: i32) -> (i32, i32) {
    %c0_i32 = arith.constant 0 : i32
    %c0_i32_0 = arith.constant 0 : i32
    return %arg0, %c0_i32 : i32, i32
  }
}

</mosaic_0001>

<llo_original>
// kernel: tpu_custom_call.1
$region0: #{tpu_custom_call.1}
  #allocation0 [shape = 'u32[]', space=smem, size = 0x4, offset = 0x4, fixed_abs, tag = 'smem constant byte address 0x4 - core index']
  #allocation1 [shape = 'u32[144,128]{1,0:T(1,128)}', space=vmem, size = 0x12000, scoped, tag = 'internal scratch']
  #allocation2 [shape = 'f32[1,1]{1,0:T(1,128)S(6)}', space=smem, size = 0x200, scoped, tag = 'scoped memory for tpu_custom_call.1']
  %s0 = inlined_call_operand.hbm [shape: f32[8,32], index: 0, kind: input, shape index: {}]
  %s1 = inlined_call_operand.hbm [shape: f32[32,128], index: 1, kind: input, shape index: {}]
  %s2 = inlined_call_operand.vmem [shape: f32[1,128], index: 2, kind: input, shape index: {}]
  %s3 = inlined_call_operand.hbm [shape: f32[128,128], index: 3, kind: input, shape index: {}]
  %s4 = inlined_call_operand.vmem [shape: f32[1,128], index: 4, kind: input, shape index: {}]
  %s5 = inlined_call_operand.vmem [shape: f32[1,128], index: 5, kind: input, shape index: {}]
  %s6 = inlined_call_operand.<no memory space> [shape: f32[1,1], index: 6, kind: input, shape index: {}]
  %s7 = inlined_call_operand.vmem [shape: f32[8,1], index: 7, kind: output, shape index: {}]
  %s8 = sld [smem:[#allocation0]]
  $region84: #{tpu_custom_call.1} parent=0
    _
  %s10 = ssub.s32 1, %s8
  %s11 = scalar_select 0, %s10, %s8
  %12 = sst [smem:[#allocation2]] %s6
  $region1: #{tpu_custom_call.1} parent=0
    #allocation3 [shape = 'u8[8192]{0}', space=vmem, size = 0x2000, scoped, tag = 'input window, operand 0, single buffered']
    #allocation4 [shape = 's32[1]{0}', space=sflag, size = 0x4, scoped, tag = 'scoped memory for tpu_custom_call.1']
    #allocation5 [shape = 'u8[16384]{0}', space=vmem, size = 0x4000, scoped, tag = 'input window, operand 1, single buffered']
    #allocation6 [shape = 's32[1]{0}', space=sflag, size = 0x4, scoped, tag = 'scoped memory for tpu_custom_call.1']
    #allocation7 [shape = 'u8[65536]{0}', space=vmem, size = 0x10000, scoped, tag = 'input window, operand 3, single buffered']
    #allocation8 [shape = 'u8[8192]{0}', space=vmem, size = 0x2000, scoped, tag = 'output window, operand 0, single buffered']
    %13 = vsyncpa [#allocation4], 0
    %14 = vsyncpa [#allocation6], 0
    // Predicated region
    $region2: #{tpu_custom_call.1} parent=1 // pred_check
      _
    $region3: #{tpu_custom_call.1} parent=1 // pred_check_branch
      %16 = sbr.rel (0) target = $region5
    $region4: #{tpu_custom_call.1} parent=1 // pred_region
      %s18 = ssub.s32 256, 128
      %19 = vsyncadd [#allocation4], %s18
      %s20 = sshll.u32 [#allocation3], 4
      %s21 = int_to_ptr.vmem [resolvable:$true] %s20
      %26 = dma.hbm_to_vmem [thread:$0]  %s0, 128, %s21, [#allocation4], 128, 128, 8
    $region5: #{tpu_custom_call.1} parent=1 // pred_fallthru
      _
    // Predicated region
    $region6: #{tpu_custom_call.1} parent=1 // pred_check
      _
    $region7: #{tpu_custom_call.1} parent=1 // pred_check_branch
      %28 = sbr.rel (0) target = $region9
    $region8: #{tpu_custom_call.1} parent=1 // pred_region
      %s30 = ssub.s32 512, 512
      %31 = vsyncadd [#allocation6], %s30
      %s32 = sshll.u32 [#allocation5], 4
      %s33 = int_to_ptr.vmem [resolvable:$true] %s32
      %38 = dma.hbm_to_vmem [thread:$0]  %s1, 512, %s33, [#allocation6], 128, 128, 8
    $region9: #{tpu_custom_call.1} parent=1 // pred_fallthru
      _
    // Predicated region
    $region10: #{tpu_custom_call.1} parent=1 // pred_check
      _
    $region11: #{tpu_custom_call.1} parent=1 // pred_check_branch
      %40 = sbr.rel (0) target = $region13
    $region12: #{tpu_custom_call.1} parent=1 // pred_region
      _
    $region13: #{tpu_custom_call.1} parent=1 // pred_fallthru
      _
    // Predicated region
    $region14: #{tpu_custom_call.1} parent=1 // pred_check
      _
    $region15: #{tpu_custom_call.1} parent=1 // pred_check_branch
      %42 = sbr.rel (0) target = $region17
    $region16: #{tpu_custom_call.1} parent=1 // pred_region
      %s44 = ssub.s32 2048, 2048
      %45 = vsyncadd [#allocation6], %s44
      %s46 = sshll.u32 [#allocation7], 4
      %s47 = int_to_ptr.vmem [resolvable:$true] %s46
      %52 = dma.hbm_to_vmem [thread:$0]  %s3, 2048, %s47, [#allocation6], 128, 128, 8
    $region17: #{tpu_custom_call.1} parent=1 // pred_fallthru
      _
    // Predicated region
    $region18: #{tpu_custom_call.1} parent=1 // pred_check
      _
    $region19: #{tpu_custom_call.1} parent=1 // pred_check_branch
      %54 = sbr.rel (0) target = $region21
    $region20: #{tpu_custom_call.1} parent=1 // pred_region
      _
    $region21: #{tpu_custom_call.1} parent=1 // pred_fallthru
      _
    // Predicated region
    $region22: #{tpu_custom_call.1} parent=1 // pred_check
      _
    $region23: #{tpu_custom_call.1} parent=1 // pred_check_branch
      %56 = sbr.rel (0) target = $region25
    $region24: #{tpu_custom_call.1} parent=1 // pred_region
      _
    $region25: #{tpu_custom_call.1} parent=1 // pred_fallthru
      _
    // Predicated region
    $region26: #{tpu_custom_call.1} parent=1 // pred_check
      _
    $region27: #{tpu_custom_call.1} parent=1 // pred_check_branch
      %58 = sbr.rel (0) target = $region29
    $region28: #{tpu_custom_call.1} parent=1 // pred_region
      _
    $region29: #{tpu_custom_call.1} parent=1 // pred_fallthru
      _
    // Predicated region
    $region30: #{tpu_custom_call.1} parent=1 // pred_check
      _
    $region31: #{tpu_custom_call.1} parent=1 // pred_check_branch
      %60 = sbr.rel (0) target = $region33
    $region32: #{tpu_custom_call.1} parent=1 // pred_region
      %61 = dma.done [#allocation4], 256
    $region33: #{tpu_custom_call.1} parent=1 // pred_fallthru
      _
    // Predicated region
    $region34: #{tpu_custom_call.1} parent=1 // pred_check
      _
    $region35: #{tpu_custom_call.1} parent=1 // pred_check_branch
      %63 = sbr.rel (0) target = $region37
    $region36: #{tpu_custom_call.1} parent=1 // pred_region
      %64 = dma.done [#allocation6], 512
    $region37: #{tpu_custom_call.1} parent=1 // pred_fallthru
      _
    // Predicated region
    $region38: #{tpu_custom_call.1} parent=1 // pred_check
      _
    $region39: #{tpu_custom_call.1} parent=1 // pred_check_branch
      %66 = sbr.rel (0) target = $region41
    $region40: #{tpu_custom_call.1} parent=1 // pred_region
      %67 = dma.done [#allocation6], 2048
    $region41: #{tpu_custom_call.1} parent=1 // pred_fallthru
      _
    %v68 = vld [vmem:[#allocation3] sm:$0xff]
    %v69 = vld [vmem:[#allocation3 + $0x8] sm:$0xff]
    %v70 = vld [vmem:[#allocation5] sm:$0xff]
    %v71 = vld [vmem:[#allocation5 + $0x8] sm:$0xff]
    %v72 = vld [vmem:[#allocation5 + $0x10] sm:$0xff]
    %v73 = vld [vmem:[#allocation5 + $0x18] sm:$0xff]
    %v74 = vld [vmem:[%s2] sm:$0x1]
    %v76 = vlaneseq
    %v77 = vshrl.u32 %v76, 7
    %v78 = vsub.s32 0, %v77
    %v79 = vrot.slane %v74, %v78
    %vm81 = vcmask 261120
    %v83 = vsel %vm81, %v68, 0
    %v86 = vsel %vm81, %v69, 0
    %88 = vmatprep.subr.mxu0 0.0
    %89 = vmatpush1.msra.mxu0 %v70
    %90 = vmatprep.subr.mxu0 0.0
    %91 = vmatpush1.msra.mxu0 %v71
    %92 = vmatprep.subr.mxu0 0.0
    %93 = vmatpush1.msra.mxu0 %v72
    %94 = vmatprep.subr.mxu0 0.0
    %95 = vmatpush1.msra.mxu0 %v73
    %96 = vmatprep.subr.mxu0 0.0
    %97 = vmatpush1.msra.mxu0 0.0
    %98 = vmatprep.subr.mxu0 0.0
    %99 = vmatpush1.msra.mxu0 0.0
    %100 = vmatprep.subr.mxu0 0.0
    %101 = vmatpush1.msra.mxu0 0.0
    %102 = vmatprep.subr.mxu0 0.0
    %103 = vmatpush1.msra.mxu0 0.0
    %104 = vmatprep.subr.mxu0 0.0
    %105 = vmatpush1.msra.mxu0 0.0
    %106 = vmatprep.subr.mxu0 0.0
    %107 = vmatpush1.msra.mxu0 0.0
    %108 = vmatprep.subr.mxu0 0.0
    %109 = vmatpush1.msra.mxu0 0.0
    %110 = vmatprep.subr.mxu0 0.0
    %111 = vmatpush1.msra.mxu0 0.0
    %112 = vmatprep.subr.mxu0 0.0
    %113 = vmatpush1.msra.mxu0 0.0
    %114 = vmatprep.subr.mxu0 0.0
    %115 = vmatpush1.msra.mxu0 0.0
    %116 = vmatprep.subr.mxu0 0.0
    %117 = vmatpush1.msra.mxu0 0.0
    %118 = vmatprep.subr.mxu0 0.0
    %119 = vmatpush1.msra.mxu0 0.0
    %120 = vmatprep.subr.mxu0 0.0
    %121 = vmatpush1.msra.mxu0 0.0
    %122 = vmatprep.subr.mxu0 0.0
    %123 = vmatpush1.msra.mxu0 0.0
    %124 = vmatprep.subr.mxu0 0.0
    %125 = vmatpush1.msra.mxu0 0.0
    %126 = vmatprep.subr.mxu0 0.0
    %127 = vmatpush1.msra.mxu0 0.0
    %128 = vmatprep.subr.mxu0 0.0
    %129 = vmatpush1.msra.mxu0 0.0
    %130 = vmatprep.subr.mxu0 0.0
    %131 = vmatpush1.msra.mxu0 0.0
    %132 = vmatprep.subr.mxu0 0.0
    %133 = vmatpush1.msra.mxu0 0.0
    %134 = vmatprep.subr.mxu0 0.0
    %135 = vmatpush1.msra.mxu0 0.0
    %136 = vmatprep.subr.mxu0 0.0
    %137 = vmatpush1.msra.mxu0 0.0
    %138 = vmatprep.subr.mxu0 0.0
    %139 = vmatpush1.msra.mxu0 0.0
    %140 = vmatprep.subr.mxu0 0.0
    %141 = vmatpush1.msra.mxu0 0.0
    %142 = vmatprep.subr.mxu0 0.0
    %143 = vmatpush1.msra.mxu0 0.0
    %144 = vmatprep.subr.mxu0 0.0
    %145 = vmatpush1.msra.mxu0 0.0
    %146 = vmatprep.subr.mxu0 0.0
    %147 = vmatpush1.msra.mxu0 0.0
    %148 = vmatprep.subr.mxu0 0.0
    %149 = vmatpush1.msra.mxu0 0.0
    %150 = vmatprep.subr.mxu0 0.0
    %151 = vmatpush1.msra.mxu0 0.0
    %152 = vmatprep.mubr.f32.mxu0 0.0
    %153 = vmatmul.mubr.f32.gmra.mrb[0].mxu0 %v83
    %v154 = vpop.f32.mrb[0].mxu0
    %v155 = vadd.f32 %v79, %v154
    %v156 = vpop.f32.mrb[0].mxu0
    %157 = vmatprep.mubr.f32.mxu0 0.0
    %158 = vmatmul.mubr.f32.gmra.mrb[0].mxu0 %v86
    %v159 = vpop.f32.mrb[0].mxu0
    %v160 = vadd.f32 %v79, %v159
    %v161 = vpop.f32.mrb[0].mxu0
    %162 = vdwg.mxu0
    %v163 = vmax.f32 %v155, 0.0
    %v164 = vmax.f32 %v160, 0.0
    %v165 = vld [vmem:[#allocation7] sm:$0xff]
    %v166 = vld [vmem:[#allocation7 + $0x8] sm:$0xff]
    %v167 = vld [vmem:[#allocation7 + $0x10] sm:$0xff]
    %v168 = vld [vmem:[#allocation7 + $0x18] sm:$0xff]
    %v169 = vld [vmem:[#allocation7 + $0x20] sm:$0xff]
    %v170 = vld [vmem:[#allocation7 + $0x28] sm:$0xff]
    %v171 = vld [vmem:[#allocation7 + $0x30] sm:$0xff]
    %v172 = vld [vmem:[#allocation7 + $0x38] sm:$0xff]
    %v173 = vld [vmem:[#allocation7 + $0x40] sm:$0xff]
    %v174 = vld [vmem:[#allocation7 + $0x48] sm:$0xff]
    %v175 = vld [vmem:[#allocation7 + $0x50] sm:$0xff]
    %v176 = vld [vmem:[#allocation7 + $0x58] sm:$0xff]
    %v177 = vld [vmem:[#allocation7 + $0x60] sm:$0xff]
    %v178 = vld [vmem:[#allocation7 + $0x68] sm:$0xff]
    %v179 = vld [vmem:[#allocation7 + $0x70] sm:$0xff]
    %v180 = vld [vmem:[#allocation7 + $0x78] sm:$0xff]
    %v181 = vld [vmem:[%s4] sm:$0x1]
    %v183 = vlaneseq
    %v184 = vshrl.u32 %v183, 7
    %v185 = vsub.s32 0, %v184
    %v186 = vrot.slane %v181, %v185
    %188 = vmatprep.subr.mxu0 0.0
    %189 = vmatpush1.msra.mxu0 %v165
    %190 = vmatprep.subr.mxu0 0.0
    %191 = vmatpush1.msra.mxu0 %v166
    %192 = vmatprep.subr.mxu0 0.0
    %193 = vmatpush1.msra.mxu0 %v167
    %194 = vmatprep.subr.mxu0 0.0
    %195 = vmatpush1.msra.mxu0 %v168
    %196 = vmatprep.subr.mxu0 0.0
    %197 = vmatpush1.msra.mxu0 %v169
    %198 = vmatprep.subr.mxu0 0.0
    %199 = vmatpush1.msra.mxu0 %v170
    %200 = vmatprep.subr.mxu0 0.0
    %201 = vmatpush1.msra.mxu0 %v171
    %202 = vmatprep.subr.mxu0 0.0
    %203 = vmatpush1.msra.mxu0 %v172
    %204 = vmatprep.subr.mxu0 0.0
    %205 = vmatpush1.msra.mxu0 %v173
    %206 = vmatprep.subr.mxu0 0.0
    %207 = vmatpush1.msra.mxu0 %v174
    %208 = vmatprep.subr.mxu0 0.0
    %209 = vmatpush1.msra.mxu0 %v175
    %210 = vmatprep.subr.mxu0 0.0
    %211 = vmatpush1.msra.mxu0 %v176
    %212 = vmatprep.subr.mxu0 0.0
    %213 = vmatpush1.msra.mxu0 %v177
    %214 = vmatprep.subr.mxu0 0.0
    %215 = vmatpush1.msra.mxu0 %v178
    %216 = vmatprep.subr.mxu0 0.0
    %217 = vmatpush1.msra.mxu0 %v179
    %218 = vmatprep.subr.mxu0 0.0
    %219 = vmatpush1.msra.mxu0 %v180
    %220 = vmatprep.subr.mxu0 0.0
    %221 = vmatpush1.msra.mxu0 0.0
    %222 = vmatprep.subr.mxu0 0.0
    %223 = vmatpush1.msra.mxu0 0.0
    %224 = vmatprep.subr.mxu0 0.0
    %225 = vmatpush1.msra.mxu0 0.0
    %226 = vmatprep.subr.mxu0 0.0
    %227 = vmatpush1.msra.mxu0 0.0
    %228 = vmatprep.subr.mxu0 0.0
    %229 = vmatpush1.msra.mxu0 0.0
    %230 = vmatprep.subr.mxu0 0.0
    %231 = vmatpush1.msra.mxu0 0.0
    %232 = vmatprep.subr.mxu0 0.0
    %233 = vmatpush1.msra.mxu0 0.0
    %234 = vmatprep.subr.mxu0 0.0
    %235 = vmatpush1.msra.mxu0 0.0
    %236 = vmatprep.subr.mxu0 0.0
    %237 = vmatpush1.msra.mxu0 0.0
    %238 = vmatprep.subr.mxu0 0.0
    %239 = vmatpush1.msra.mxu0 0.0
    %240 = vmatprep.subr.mxu0 0.0
    %241 = vmatpush1.msra.mxu0 0.0
    %242 = vmatprep.subr.mxu0 0.0
    %243 = vmatpush1.msra.mxu0 0.0
    %244 = vmatprep.subr.mxu0 0.0
    %245 = vmatpush1.msra.mxu0 0.0
    %246 = vmatprep.subr.mxu0 0.0
    %247 = vmatpush1.msra.mxu0 0.0
    %248 = vmatprep.subr.mxu0 0.0
    %249 = vmatpush1.msra.mxu0 0.0
    %250 = vmatprep.subr.mxu0 0.0
    %251 = vmatpush1.msra.mxu0 0.0
    %252 = vmatprep.mubr.f32.mxu0 0.0
    %253 = vmatmul.mubr.f32.gmra.mrb[0].mxu0 %v163
    %v254 = vpop.f32.mrb[0].mxu0
    %v255 = vadd.f32 %v186, %v254
    %v256 = vpop.f32.mrb[0].mxu0
    %257 = vmatprep.mubr.f32.mxu0 0.0
    %258 = vmatmul.mubr.f32.gmra.mrb[0].mxu0 %v164
    %v259 = vpop.f32.mrb[0].mxu0
    %v260 = vadd.f32 %v186, %v259
    %v261 = vpop.f32.mrb[0].mxu0
    %262 = vdwg.mxu0
    %v263 = vmax.f32 %v255, 0.0
    %v264 = vmax.f32 %v260, 0.0
    %v265 = vld [vmem:[%s5] sm:$0x1]
    %v267 = vlaneseq
    %v268 = vshrl.u32 %v267, 7
    %v269 = vsub.s32 0, %v268
    %v270 = vrot.slane %v265, %v269
    %v272 = vmul.f32 %v263, %v270
    %v273 = vmul.f32 %v264, %v270
    %274 = vadd.xlane.f32.xlu0 %v272
    %v275 = vpop.xlane.xlu0 %274
    %276 = vadd.xlane.f32.xlu0 %v273
    %v277 = vpop.xlane.xlu0 %276
    %s278 = sld [smem:[#allocation2]]
    %v279 = vstv %s278
    %v280 = vadd.f32 %v275, %v279
    %v281 = vadd.f32 %v277, %v279
    %v282 = vxor.u32 %v280, 2147483648
    %v283 = vxor.u32 %v281, 2147483648
    %v284 = vmul.f32 %v282, 1.442695
    %v285 = vpow.pop %v284
    %v286 = vmul.f32 %v283, 1.442695
    %v287 = vpow.pop %v286
    %v288 = vadd.f32 %v285, 1.0
    %v289 = vadd.f32 %v287, 1.0
    %v290 = vrcp.pop %v288
    %v291 = vmul.f32 1.0, %v290
    %v292 = vrcp.pop %v289
    %v293 = vmul.f32 1.0, %v292
    %vm294 = vcmask 7168
    %295 = vst.msk [vmem:[#allocation8] sm:$0xff] %vm294, %v291
    %296 = vst.msk [vmem:[#allocation8 + $0x8] sm:$0xff] %vm294, %v293
    // Predicated region
    $region42: #{tpu_custom_call.1} parent=1 // pred_check
      _
    $region43: #{tpu_custom_call.1} parent=1 // pred_check_branch
      %298 = sbr.rel (0) target = $region45
    $region44: #{tpu_custom_call.1} parent=1 // pred_region
      // Predicated region
      $region46: #{tpu_custom_call.1} parent=44 // pred_check
        _
      $region47: #{tpu_custom_call.1} parent=44 // pred_check_branch
        %300 = sbr.rel (0) target = $region49
      $region48: #{tpu_custom_call.1} parent=44 // pred_region
        // Predicated region
        $region50: #{tpu_custom_call.1} parent=48 // pred_check
          _
        $region51: #{tpu_custom_call.1} parent=48 // pred_check_branch
          %302 = sbr.rel (0) target = $region53
        $region52: #{tpu_custom_call.1} parent=48 // pred_region
          // Predicated region
          $region65: #{tpu_custom_call.1} parent=52 // pred_check
            _
          $region66: #{tpu_custom_call.1} parent=52 // pred_check_branch
            %317 = sbr.rel (0) target = $region68
          $region67: #{tpu_custom_call.1} parent=52 // pred_region
            loop: start=0, step=1, limit=1
            $region69: #{tpu_custom_call.1} parent=67 // loop_pre_header
              _
            $region70: #{tpu_custom_call.1} parent=67 // loop_header
              %s319 = sphi 0, %s323
              %p320 = scmp.ge.s32.totalorder %s319, 1
              %s324 = sphi [#allocation8], [#allocation8]
              %s325 = sphi %s7, %s7
            $region71: #{tpu_custom_call.1} parent=67 // loop_header_branch
              %322 = sbr.rel (%p320) target = $region75
            $region72: #{tpu_custom_call.1} parent=67 // loop_body
              %v326 = vld [vmem:[%s324] sm:$0xff]
              %327 = vst [vmem:[%s325] sm:$0xff] %v326
            $region73: #{tpu_custom_call.1} parent=67 // loop_footer
              %s323 = sadd.s32 1, %s319
            $region74: #{tpu_custom_call.1} parent=67 // loop_footer_branch
              %318 = sbr.rel target = $region70
            $region75: #{tpu_custom_call.1} parent=67 // loop_exit
              _
          $region68: #{tpu_custom_call.1} parent=52 // pred_fallthru
            _
          // Predicated region
          $region76: #{tpu_custom_call.1} parent=52 // pred_check
            _
          $region77: #{tpu_custom_call.1} parent=52 // pred_check_branch
            %329 = sbr.rel target = $region79
          $region78: #{tpu_custom_call.1} parent=52 // pred_region
            _
          $region79: #{tpu_custom_call.1} parent=52 // pred_fallthru
            _
        $region53: #{tpu_custom_call.1} parent=48 // pred_fallthru
          _
        // Predicated region
        $region54: #{tpu_custom_call.1} parent=48 // pred_check
          _
        $region55: #{tpu_custom_call.1} parent=48 // pred_check_branch
          %304 = sbr.rel target = $region57
        $region56: #{tpu_custom_call.1} parent=48 // pred_region
          loop: start=0, step=1, limit=1
          $region58: #{tpu_custom_call.1} parent=56 // loop_pre_header
            _
          $region59: #{tpu_custom_call.1} parent=56 // loop_header
            %s307 = sphi 0, %s311
            %p308 = scmp.ge.s32.totalorder %s307, 1
            %s312 = sphi [#allocation8], [#allocation8]
            %s313 = sphi %s7, %s7
          $region60: #{tpu_custom_call.1} parent=56 // loop_header_branch
            %310 = sbr.rel (%p308) target = $region64
          $region61: #{tpu_custom_call.1} parent=56 // loop_body
            %v314 = vld [vmem:[%s312] sm:$0xff]
            %315 = vst [vmem:[%s313] sm:$0xff] %v314
          $region62: #{tpu_custom_call.1} parent=56 // loop_footer
            %s311 = sadd.s32 1, %s307
          $region63: #{tpu_custom_call.1} parent=56 // loop_footer_branch
            %306 = sbr.rel target = $region59
          $region64: #{tpu_custom_call.1} parent=56 // loop_exit
            _
        $region57: #{tpu_custom_call.1} parent=48 // pred_fallthru
          _
      $region49: #{tpu_custom_call.1} parent=44 // pred_fallthru
        _
      %330 = vnop
    $region45: #{tpu_custom_call.1} parent=1 // pred_fallthru
      _
    // Predicated region
    $region80: #{tpu_custom_call.1} parent=1 // pred_check
      _
    $region81: #{tpu_custom_call.1} parent=1 // pred_check_branch
      %332 = sbr.rel (0) target = $region83
    $region82: #{tpu_custom_call.1} parent=1 // pred_region
      _
    $region83: #{tpu_custom_call.1} parent=1 // pred_fallthru
      _
    %333 = vsyncpa [#allocation4], 1
    %334 = vsyncpa [#allocation6], 1

</llo_original>
